<compile_context>
chip_gen: v5e
topology: v5e:2x2
jax: 0.10.0
libtpu: 0.0.40
codegen_flags: <defaults>
</compile_context>

<pallas_src>
import jax
import jax.numpy as jnp
from jax import lax
from jax.experimental import pallas as pl
from jax.experimental.pallas import tpu as pltpu
import numpy as np

TM_TARGET = 1024      # spatial tile (lanes); 512-1024 rows already ~85% of HBM roofline
MIN_GRID_STEPS = 8    # give v7x's two TensorCores >= 4 grid steps each when possible


def _round_up(x, mult):
    return ((x + mult - 1) // mult) * mult


def _choose_tm(mi, n_images):
    """Spatial tile size: prefer multiples of 128 (lane-dense stores) that
    divide Ho*Wo, keep >= MIN_GRID_STEPS total grid steps when possible, and
    fall back to the full per-image extent if Ho*Wo has no 128-multiple divisor."""
    cands = [t for t in range(128, min(mi, TM_TARGET) + 1, 128) if mi % t == 0]
    if not cands:
        return mi
    ok = [t for t in cands if n_images * (mi // t) >= MIN_GRID_STEPS]
    return max(ok) if ok else min(cands)


def _gram_kernel(a_ref, g_ref):
    # A tile is (Kp, TM) bf16, K-major.  G = A A^T on the MXU (f32 accum).
    # The last K row of A is 1 for every valid spatial position, so
    # G[-1, :] = per-feature column sums and G[-1, -1] = valid-row count.
    a = a_ref[...]
    g_ref[...] = lax.dot_general(
        a, a, (((1,), (1,)), ((), ())), preferred_element_type=jnp.float32)


def _conv_bn_relu_kernel(a_ref, w_ref, scale_ref, shift_ref, o_ref):
    # Recompute the cheap conv matmul channel-major: (Cout,Kp)@(Kp,TM) ->
    # (Cout,TM), so the store is lane-dense and already NCHW-ordered.
    y = jnp.dot(w_ref[...], a_ref[...], preferred_element_type=jnp.float32)
    o_ref[...] = jnp.maximum(y * scale_ref[...] + shift_ref[...], 0.0)


def _im2col_kmajor(x_nchw, kh, kw, stride, pad, kp):
    """K-major im2col in bf16: (N, Kp, Ho*Wo), built with ONE concatenate.
    K rows ordered (kh, kw, cin); rows k..kp-2 are zero pad, row kp-1 is ones."""
    n, c, h, w = x_nchw.shape
    xb = x_nchw.astype(jnp.bfloat16)
    xp = jnp.pad(xb, ((0, 0), (0, 0), (pad, pad), (pad, pad)))
    ho = (h + 2 * pad - kh) // stride + 1
    wo = (w + 2 * pad - kw) // stride + 1
    mi = ho * wo
    cols = []
    for i in range(kh):
        for j in range(kw):
            cols.append(
                xp[:, :, i:i + stride * ho:stride, j:j + stride * wo:stride]
                .reshape(n, c, mi))
    k = kh * kw * c
    extra = []
    if kp - 1 - k > 0:
        extra.append(jnp.zeros((n, kp - 1 - k, mi), jnp.bfloat16))
    extra.append(jnp.ones((n, 1, mi), jnp.bfloat16))
    a = jnp.concatenate(cols + extra, axis=1)            # (N, Kp, Mi) bf16
    return a, ho, wo
    # TODO(synk): longer term, do the im2col inside the kernel (manual DMA of
    # the padded NCHW input with a 1-row halo) to drop the patch-matrix
    # materialization entirely (~4x less A-side HBM traffic).


def stem_forward(x_nchw, conv_w, gamma, beta, *, stride=2, pad=1, eps=1e-5):
    """Conv2d(no bias) -> BatchNorm2d(batch stats) -> ReLU. NCHW in, NCHW out."""
    n, cin, h, w = x_nchw.shape
    cout, _, kh, kw = conv_w.shape
    k = kh * kw * cin
    kp = max(_round_up(k + 1, 16), 32)          # +1 for the ones row

    a, ho, wo = _im2col_kmajor(x_nchw, kh, kw, stride, pad, kp)   # (N,Kp,Mi)
    mi = ho * wo
    m = n * mi                                  # true BN row count
    tm = _choose_tm(mi, n)
    nt = mi // tm
    assert tm * nt == mi

    # Conv weight OIHW -> (Cout, Kh*Kw*Cin) -> K-pad to (Cout, Kp).  bf16 copy
    # feeds the MXU; the bf16-rounded f32 copy is used for the BN-stat glue so
    # pass-1/pass-2 numerics match.
    w_t = jnp.transpose(conv_w, (0, 2, 3, 1)).reshape(cout, k)
    w_t = jnp.pad(w_t.astype(jnp.float32), ((0, 0), (0, kp - k)))
    w_t_bf16 = w_t.astype(jnp.bfloat16)
    w_glue = w_t_bf16.astype(jnp.float32)

    # --- Pallas pass 1: per-tile Gram A A^T on the MXU (tiny writes) ---------
    grams = pl.pallas_call(
        _gram_kernel,
        out_shape=jax.ShapeDtypeStruct((n, nt, kp, kp), jnp.float32),
        grid=(n, nt),
        in_specs=[pl.BlockSpec((None, kp, tm), lambda b, j: (b, 0, j))],
        out_specs=pl.BlockSpec((None, None, kp, kp), lambda b, j: (b, j, 0, 0)),
        compiler_params=pltpu.CompilerParams(
            dimension_semantics=("parallel", "parallel")),
    )(a)

    # --- tiny glue: BN batch stats from the Gram, folded to scale/shift ------
    g = jnp.sum(grams, axis=(0, 1))                        # (Kp, Kp) f32
    sum_y = w_glue @ g[kp - 1, :]                          # (Cout,)  = sum_m y
    sum_y2 = jnp.sum((w_glue @ g) * w_glue, axis=1)        # (Cout,)  = sum_m y^2
    mean = sum_y / m
    var = jnp.maximum(sum_y2 / m - mean * mean, 0.0)       # biased var (PyTorch BN)
    scale = gamma.astype(jnp.float32) * lax.rsqrt(var + eps)
    shift = beta.astype(jnp.float32) - mean * scale

    # --- Pallas pass 2: recompute conv (channel-major) + fused BN + ReLU -----
    # Output (N, Cout, Ho*Wo): lane-dense stores, already NCHW-ordered, so no
    # XLA transpose afterwards.  (Switch the out dtype to bf16 if the next
    # layer consumes bf16 activations -- halves the largest HBM stream.)
    out = pl.pallas_call(
        _conv_bn_relu_kernel,
        out_shape=jax.ShapeDtypeStruct((n, cout, mi), jnp.float32),
        grid=(n, nt),
        in_specs=[
            pl.BlockSpec((None, kp, tm), lambda b, j: (b, 0, j)),
            pl.BlockSpec((cout, kp), lambda b, j: (0, 0)),
            pl.BlockSpec((cout, 1), lambda b, j: (0, 0)),
            pl.BlockSpec((cout, 1), lambda b, j: (0, 0)),
        ],
        out_specs=pl.BlockSpec((None, cout, tm), lambda b, j: (b, 0, j)),
        compiler_params=pltpu.CompilerParams(
            dimension_semantics=("parallel", "parallel")),
    )(a, w_t_bf16, scale.reshape(cout, 1), shift.reshape(cout, 1))

    return out.reshape(n, cout, ho, wo)                    # free reshape, NCHW


def _reference(x_nchw, conv_w, gamma, beta, *, stride=2, pad=1, eps=1e-5,
               matmul_dtype=jnp.float32):
    """Pure-JAX reference matching PyTorch Stem.forward (BN in train mode)."""
    y = lax.conv_general_dilated(
        x_nchw.astype(matmul_dtype), conv_w.astype(matmul_dtype),
        window_strides=(stride, stride),
        padding=((pad, pad), (pad, pad)),
        dimension_numbers=("NCHW", "OIHW", "NCHW"),
        preferred_element_type=jnp.float32)
    mean = jnp.mean(y, axis=(0, 2, 3), keepdims=True)
    var = jnp.mean((y - mean) ** 2, axis=(0, 2, 3), keepdims=True)
    yhat = (y - mean) * lax.rsqrt(var + eps)
    yhat = yhat * gamma.reshape(1, -1, 1, 1) + beta.reshape(1, -1, 1, 1)
    return jnp.maximum(yhat, 0.0)


if __name__ == "__main__":
    key = jax.random.PRNGKey(0)
    k_x, k_w, k_g, k_b = jax.random.split(key, 4)

    # Module defaults: in_channels=3, out_channels=32, kernel=3, stride=2, pad=1.
    # H=W=32 keeps the demo small while exercising the multi-tile path
    # (Ho*Wo = 256 -> two 128-lane tiles per image, 2x2 grid, Gram reduction
    # across 4 tiles).
    N, Cin, H, W = 2, 3, 32, 32
    Cout, K = 32, 3

    x = jax.random.normal(k_x, (N, Cin, H, W), dtype=jnp.float32)
    conv_w = jax.random.normal(k_w, (Cout, Cin, K, K), dtype=jnp.float32) * 0.1
    gamma = 1.0 + 0.05 * jax.random.normal(k_g, (Cout,), dtype=jnp.float32)
    beta = 0.1 * jax.random.normal(k_b, (Cout,), dtype=jnp.float32)

    stem_fn = jax.jit(stem_forward)
    out = jax.block_until_ready(stem_fn(x, conv_w, gamma, beta))
    assert out.shape == (N, Cout, H // 2, W // 2), out.shape

    # Tight check vs a reference using the same bf16-rounded matmul inputs
    # (validates kernel math / layout, up to f32 summation order).
    ref_bf16 = jax.block_until_ready(
        _reference(x, conv_w, gamma, beta, matmul_dtype=jnp.bfloat16))
    np.testing.assert_allclose(np.asarray(out), np.asarray(ref_bf16),
                               rtol=2e-3, atol=2e-3)

    # Looser check vs the pure-f32 module semantics (tolerance accounts for the
    # bf16 MXU inputs; accumulation is f32).
    ref_f32 = jax.block_until_ready(_reference(x, conv_w, gamma, beta))
    np.testing.assert_allclose(np.asarray(out), np.asarray(ref_f32),
                               rtol=2e-2, atol=2e-2)

    print("KERNEL_OK")
</pallas_src>

<mosaic_0001>
module attributes {stable_mosaic.version = 11 : i64} {
  func.func @_gram_kernel(%arg0: i32, %arg1: i32, %arg2: memref<1x32x128xbf16, #tpu.memory_space<vmem>>, %arg3: memref<1x1x32x32xf32, #tpu.memory_space<vmem>>) attributes {dimension_semantics = [#tpu.dimension_semantics<parallel>, #tpu.dimension_semantics<parallel>], iteration_bounds = array<i64: 2, 2>, scalar_prefetch = 0 : i64, scratch_operands = 0 : i64, tpu.core_type = #tpu.core_type<tc>, window_params = [{transform_indices = @transform_0, window_bounds = array<i64: 1, 32, 128>}, {transform_indices = @transform_1, window_bounds = array<i64: 1, 1, 32, 32>}]} {
    %c0 = arith.constant 0 : index
    %c0_0 = arith.constant 0 : index
    %c0_1 = arith.constant 0 : index
    %0 = vector.load %arg2[%c0, %c0_0, %c0_1] : memref<1x32x128xbf16, #tpu.memory_space<vmem>>, vector<1x32x128xbf16>
    %1 = vector.shape_cast %0 : vector<1x32x128xbf16> to vector<32x128xbf16>
    %cst = arith.constant dense<0.000000e+00> : vector<32x32xf32>
    %2 = tpu.matmul %1, %1, %cst {dimension_numbers = #tpu.dot_dimension_numbers<[1], [1], [0], [0], [0, 0, 1, 0], [], []>} : vector<32x128xbf16>, vector<32x128xbf16>, vector<32x32xf32> -> vector<32x32xf32>
    %c0_2 = arith.constant 0 : index
    %c0_3 = arith.constant 0 : index
    %c0_4 = arith.constant 0 : index
    %c0_5 = arith.constant 0 : index
    %3 = vector.load %arg3[%c0_2, %c0_3, %c0_4, %c0_5] : memref<1x1x32x32xf32, #tpu.memory_space<vmem>>, vector<1x1x32x32xf32>
    %4 = vector.shape_cast %3 : vector<1x1x32x32xf32> to vector<32x32xf32>
    %5 = vector.shape_cast %2 : vector<32x32xf32> to vector<1x1x32x32xf32>
    tpu.vector_store %arg3[%c0_2, %c0_3, %c0_4, %c0_5], %5 {strides = array<i32>} : memref<1x1x32x32xf32, #tpu.memory_space<vmem>>, vector<1x1x32x32xf32>,
    return
  }
  func.func @transform_0(%arg0: i32, %arg1: i32) -> (i32, i32, i32) {
    %c0_i32 = arith.constant 0 : i32
    %c0_i32_0 = arith.constant 0 : i32
    return %arg0, %c0_i32, %arg1 : i32, i32, i32
  }
  func.func @transform_1(%arg0: i32, %arg1: i32) -> (i32, i32, i32, i32) {
    %c0_i32 = arith.constant 0 : i32
    %c0_i32_0 = arith.constant 0 : i32
    %c0_i32_1 = arith.constant 0 : i32
    return %arg0, %arg1, %c0_i32, %c0_i32_0 : i32, i32, i32, i32
  }
}

module attributes {stable_mosaic.version = 11 : i64} {
  func.func @_conv_bn_relu_kernel(%arg0: i32, %arg1: i32, %arg2: memref<1x32x128xbf16, #tpu.memory_space<vmem>>, %arg3: memref<32x32xbf16, #tpu.memory_space<vmem>>, %arg4: memref<32x1xf32, #tpu.memory_space<vmem>>, %arg5: memref<32x1xf32, #tpu.memory_space<vmem>>, %arg6: memref<1x32x128xf32, #tpu.memory_space<vmem>>) attributes {dimension_semantics = [#tpu.dimension_semantics<parallel>, #tpu.dimension_semantics<parallel>], iteration_bounds = array<i64: 2, 2>, scalar_prefetch = 0 : i64, scratch_operands = 0 : i64, tpu.core_type = #tpu.core_type<tc>, window_params = [{transform_indices = @transform_0, window_bounds = array<i64: 1, 32, 128>}, {pipeline_mode = #tpu.pipeline_mode<synchronous>, transform_indices = @transform_1, window_bounds = array<i64: 32, 32>}, {pipeline_mode = #tpu.pipeline_mode<synchronous>, transform_indices = @transform_2, window_bounds = array<i64: 32, 1>}, {pipeline_mode = #tpu.pipeline_mode<synchronous>, transform_indices = @transform_3, window_bounds = array<i64: 32, 1>}, {transform_indices = @transform_4, window_bounds = array<i64: 1, 32, 128>}]} {
    %c0 = arith.constant 0 : index
    %c0_0 = arith.constant 0 : index
    %0 = vector.load %arg3[%c0, %c0_0] : memref<32x32xbf16, #tpu.memory_space<vmem>>, vector<32x32xbf16>
    %c0_1 = arith.constant 0 : index
    %c0_2 = arith.constant 0 : index
    %c0_3 = arith.constant 0 : index
    %1 = vector.load %arg2[%c0_1, %c0_2, %c0_3] : memref<1x32x128xbf16, #tpu.memory_space<vmem>>, vector<1x32x128xbf16>
    %2 = vector.shape_cast %1 : vector<1x32x128xbf16> to vector<32x128xbf16>
    %cst = arith.constant dense<0.000000e+00> : vector<32x128xf32>
    %3 = tpu.matmul %0, %2, %cst {dimension_numbers = #tpu.dot_dimension_numbers<[1], [0], [0], [1], [0, 0, 1, 1], [], []>} : vector<32x32xbf16>, vector<32x128xbf16>, vector<32x128xf32> -> vector<32x128xf32>
    %c0_4 = arith.constant 0 : index
    %c0_5 = arith.constant 0 : index
    %4 = vector.load %arg4[%c0_4, %c0_5] : memref<32x1xf32, #tpu.memory_space<vmem>>, vector<32x1xf32>
    %5 = vector.broadcast %4 : vector<32x1xf32> to vector<32x128xf32>
    %6 = arith.mulf %3, %5 : vector<32x128xf32>
    %c0_6 = arith.constant 0 : index
    %c0_7 = arith.constant 0 : index
    %7 = vector.load %arg5[%c0_6, %c0_7] : memref<32x1xf32, #tpu.memory_space<vmem>>, vector<32x1xf32>
    %8 = vector.broadcast %7 : vector<32x1xf32> to vector<32x128xf32>
    %9 = arith.addf %6, %8 : vector<32x128xf32>
    %cst_8 = arith.constant 0.000000e+00 : f32
    %10 = vector.broadcast %cst_8 : f32 to vector<32x128xf32>
    %11 = arith.maximumf %9, %10 : vector<32x128xf32>
    %c0_9 = arith.constant 0 : index
    %c0_10 = arith.constant 0 : index
    %c0_11 = arith.constant 0 : index
    %12 = vector.load %arg6[%c0_9, %c0_10, %c0_11] : memref<1x32x128xf32, #tpu.memory_space<vmem>>, vector<1x32x128xf32>
    %13 = vector.shape_cast %12 : vector<1x32x128xf32> to vector<32x128xf32>
    %14 = vector.shape_cast %11 : vector<32x128xf32> to vector<1x32x128xf32>
    tpu.vector_store %arg6[%c0_9, %c0_10, %c0_11], %14 {strides = array<i32>} : memref<1x32x128xf32, #tpu.memory_space<vmem>>, vector<1x32x128xf32>,
    return
  }
  func.func @transform_0(%arg0: i32, %arg1: i32) -> (i32, i32, i32) {
    %c0_i32 = arith.constant 0 : i32
    %c0_i32_0 = arith.constant 0 : i32
    return %arg0, %c0_i32, %arg1 : i32, i32, i32
  }
  func.func @transform_1(%arg0: i32, %arg1: i32) -> (i32, i32) {
    %c0_i32 = arith.constant 0 : i32
    %c0_i32_0 = arith.constant 0 : i32
    %c0_i32_1 = arith.constant 0 : i32
    return %c0_i32, %c0_i32_0 : i32, i32
  }
  func.func @transform_2(%arg0: i32, %arg1: i32) -> (i32, i32) {
    %c0_i32 = arith.constant 0 : i32
    %c0_i32_0 = arith.constant 0 : i32
    %c0_i32_1 = arith.constant 0 : i32
    return %c0_i32, %c0_i32_0 : i32, i32
  }
  func.func @transform_3(%arg0: i32, %arg1: i32) -> (i32, i32) {
    %c0_i32 = arith.constant 0 : i32
    %c0_i32_0 = arith.constant 0 : i32
    %c0_i32_1 = arith.constant 0 : i32
    return %c0_i32, %c0_i32_0 : i32, i32
  }
  func.func @transform_4(%arg0: i32, %arg1: i32) -> (i32, i32, i32) {
    %c0_i32 = arith.constant 0 : i32
    %c0_i32_0 = arith.constant 0 : i32
    return %arg0, %c0_i32, %arg1 : i32, i32, i32
  }
}

</mosaic_0001>

<llo_original>
// kernel: stem_forward.2
$region0: #{stem_forward.2}
  #allocation0 [shape = 'u32[]', space=smem, size = 0x4, offset = 0x4, fixed_abs, tag = 'smem constant byte address 0x4 - core index']
  #allocation1 [shape = 'u32[72,128]{1,0:T(1,128)}', space=vmem, size = 0x9000, scoped, tag = 'internal scratch']
  %s0 = inlined_call_operand.vmem [shape: bf16[2,32,256], index: 0, kind: input, shape index: {}]
  %s1 = inlined_call_operand.vmem [shape: f32[2,2,32,32], index: 1, kind: output, shape index: {}]
  %s2 = sld [smem:[#allocation0]]
  $region78: #{stem_forward.2} parent=0
    _
  %s4 = ssub.s32 1, %s2
  %s5 = scalar_select 0, %s4, %s2
  $region1: #{stem_forward.2} parent=0
    #allocation2 [shape = 'u8[16384]{0}', space=vmem, size = 0x4000, scoped, tag = 'input window, operand 0']
    loop: start=0, step=1, limit=6
    $region2: #{stem_forward.2} parent=1 // loop_pre_header
      _
    $region3: #{stem_forward.2} parent=1 // loop_header
      %s7 = sphi 0, %s11
      %p8 = scmp.ge.s32.totalorder %s7, 6
      %s14 = sphi 0, %s26
      %s15 = sphi 0, %s22
      %s16 = sphi 0, %s14
      %s17 = sphi 0, %s15
      %s18 = sphi 0, %s16
      %s19 = sphi 0, %s17
      %s31 = sphi 0, %s33
      %s34 = sphi 0, %s31
      %s35 = sphi 0, %s34
      %s51 = sphi 0, %s35
      %s59 = sphi 0, %s61
      %s62 = sphi 0, %s59
      %s63 = sphi 0, %s62
      %s79 = sphi 0, %s63
    $region4: #{stem_forward.2} parent=1 // loop_header_branch
      %10 = sbr.rel (%p8) target = $region8
    $region5: #{stem_forward.2} parent=1 // loop_body
      %s12 = ssub.s32 %s7, 1
      %s13 = ssub.s32 %s7, 2
      %s20 = sadd.s32 1, %s15
      %p21 = scmp.ge.s32.totalorder %s20, 2
      %s22 = scalar_select %p21, 0, %s20
      %s23 = sadd.s32 1, %s14
      %s24 = scalar_select %p21, %s23, %s14
      %p25 = scmp.ge.s32.totalorder %s24, 2
      %s26 = scalar_select %p25, 0, %s24
      %s27 = ssub.s32 %s14, %s26
      %s28 = ssub.s32 %s15, %s22
      %s29 = sor.u32 %s27, %s28
      %p30 = scmp.eq.s32.totalorder %s29, 0
      %s32 = sadd.s32 %s31, 1
      %s33 = scalar_select %p30, %s31, %s32
      %p36 = pneg %p30
      %p37 = scmp.eq.s32.totalorder %s7, 3
      %p38 = por %p36, %p37
      %p39 = scmp.ne.s32.totalorder %s31, %s34
      %p40 = scmp.eq.s32.totalorder %s7, 0
      %p41 = por %p39, %p40
      %p42 = scmp.ne.s32.totalorder %s31, %s34
      %p43 = scmp.eq.s32.totalorder %s12, 3
      %p44 = por %p42, %p43
      %p45 = scmp.ne.s32.totalorder %s34, %s35
      %p46 = scmp.eq.s32.totalorder %s12, 0
      %p47 = por %p45, %p46
      %p48 = scmp.ne.s32.totalorder %s34, %s35
      %p49 = scmp.eq.s32.totalorder %s13, 3
      %p50 = por %p48, %p49
      %p52 = scmp.ne.s32.totalorder %s35, %s51
      %p53 = scmp.eq.s32.totalorder %s13, 0
      %p54 = por %p52, %p53
      %s55 = ssub.s32 %s14, %s26
      %s56 = ssub.s32 %s15, %s22
      %s57 = sor.u32 %s55, %s56
      %p58 = scmp.eq.s32.totalorder %s57, 0
      %s60 = sadd.s32 %s59, 1
      %s61 = scalar_select %p58, %s59, %s60
      %p64 = pneg %p58
      %p65 = scmp.eq.s32.totalorder %s7, 3
      %p66 = por %p64, %p65
      %p67 = scmp.ne.s32.totalorder %s59, %s62
      %p68 = scmp.eq.s32.totalorder %s7, 0
      %p69 = por %p67, %p68
      %p70 = scmp.ne.s32.totalorder %s59, %s62
      %p71 = scmp.eq.s32.totalorder %s12, 3
      %p72 = por %p70, %p71
      %p73 = scmp.ne.s32.totalorder %s62, %s63
      %p74 = scmp.eq.s32.totalorder %s12, 0
      %p75 = por %p73, %p74
      %p76 = scmp.ne.s32.totalorder %s62, %s63
      %p77 = scmp.eq.s32.totalorder %s13, 3
      %p78 = por %p76, %p77
      %p80 = scmp.ne.s32.totalorder %s63, %s79
      %p81 = scmp.eq.s32.totalorder %s13, 0
      %p82 = por %p80, %p81
      %p83 = scmp.le.s32.totalorder 1, %s7
      %p84 = scmp.lt.s32.totalorder %s7, 5
      %p85 = pnand %p83, %p84
      %p86 = pneg %p85
      // Predicated region
      $region9: #{stem_forward.2} parent=5 // pred_check
        _
      $region10: #{stem_forward.2} parent=5 // pred_check_branch
        %88 = sbr.rel (%p85) target = $region12
      $region11: #{stem_forward.2} parent=5 // pred_region
        %s89 = ssub.s32 %s7, 1
      $region12: #{stem_forward.2} parent=5 // pred_fallthru
        _
      %p90 = scmp.lt.s32.totalorder %s7, 4
      // Predicated region
      $region13: #{stem_forward.2} parent=5 // pred_check
        %p91 = pneg %p90
      $region14: #{stem_forward.2} parent=5 // pred_check_branch
        %93 = sbr.rel (%p91) target = $region16
      $region15: #{stem_forward.2} parent=5 // pred_region
        // Predicated region
        $region17: #{stem_forward.2} parent=15 // pred_check
          %p94 = pneg %p41
        $region18: #{stem_forward.2} parent=15 // pred_check_branch
          %96 = sbr.rel (%p94) target = $region20
        $region19: #{stem_forward.2} parent=15 // pred_region
          %s97 = sand.u32 %s31, 1
          %s98 = sand.u32 %s31, 1
          %s99 = smul.addr %s98, 16
          %s100 = scalar_lea.vmem [#allocation2], %s99
          %s101 = smul.addr %s14, 8
          %s102 = sadd.s32 %s15, %s101
          %s103 = smul.addr %s102, 4
          %s104 = scalar_lea.vmem %s0, %s103
          // Predicated region
          $region21: #{stem_forward.2} parent=19 // pred_check
            _
          $region22: #{stem_forward.2} parent=19 // pred_check_branch
            %106 = sbr.rel (0) target = $region24
          $region23: #{stem_forward.2} parent=19 // pred_region
            // Predicated region
            $region25: #{stem_forward.2} parent=23 // pred_check
              _
            $region26: #{stem_forward.2} parent=23 // pred_check_branch
              %108 = sbr.rel target = $region28
            $region27: #{stem_forward.2} parent=23 // pred_region
              // Predicated region
              $region40: #{stem_forward.2} parent=27 // pred_check
                _
              $region41: #{stem_forward.2} parent=27 // pred_check_branch
                %130 = sbr.rel (0) target = $region43
              $region42: #{stem_forward.2} parent=27 // pred_region
                loop: start=0, step=1, limit=1
                $region44: #{stem_forward.2} parent=42 // loop_pre_header
                  _
                $region45: #{stem_forward.2} parent=42 // loop_header
                  %s132 = sphi 0, %s136
                  %p133 = scmp.ge.s32.totalorder %s132, 1
                  %s137 = sphi %s104, %s104
                  %s138 = sphi %s100, %s100
                $region46: #{stem_forward.2} parent=42 // loop_header_branch
                  %135 = sbr.rel (%p133) target = $region50
                $region47: #{stem_forward.2} parent=42 // loop_body
                  _
                $region48: #{stem_forward.2} parent=42 // loop_footer
                  %s136 = sadd.s32 1, %s132
                $region49: #{stem_forward.2} parent=42 // loop_footer_branch
                  %131 = sbr.rel target = $region45
                $region50: #{stem_forward.2} parent=42 // loop_exit
                  _
                %s140 = ssub.s32 16, 1
                loop: start=0, step=1, limit=1
                $region51: #{stem_forward.2} parent=42 // loop_pre_header
                  _
                $region52: #{stem_forward.2} parent=42 // loop_header
                  %s142 = sphi 0, %s146
                  %p143 = scmp.ge.s32.totalorder %s142, 1
                  %s147 = sphi %s104, %s104
                  %s148 = sphi %s100, %s100
                $region53: #{stem_forward.2} parent=42 // loop_header_branch
                  %145 = sbr.rel (%p143) target = $region57
                $region54: #{stem_forward.2} parent=42 // loop_body
                  %v149 = vld [vmem:[%s147] sm:%s140]
                  %150 = vst [vmem:[%s148] sm:%s140] %v149
                  %v151 = vld [vmem:[%s147 + $0x8] sm:%s140]
                  %152 = vst [vmem:[%s148 + $0x4] sm:%s140] %v151
                  %v153 = vld [vmem:[%s147 + $0x10] sm:%s140]
                  %154 = vst [vmem:[%s148 + $0x8] sm:%s140] %v153
                  %v155 = vld [vmem:[%s147 + $0x18] sm:%s140]
                  %156 = vst [vmem:[%s148 + $0xc] sm:%s140] %v155
                $region55: #{stem_forward.2} parent=42 // loop_footer
                  %s146 = sadd.s32 1, %s142
                $region56: #{stem_forward.2} parent=42 // loop_footer_branch
                  %141 = sbr.rel target = $region52
                $region57: #{stem_forward.2} parent=42 // loop_exit
                  _
              $region43: #{stem_forward.2} parent=27 // pred_fallthru
                _
            $region28: #{stem_forward.2} parent=23 // pred_fallthru
              _
            // Predicated region
            $region29: #{stem_forward.2} parent=23 // pred_check
              _
            $region30: #{stem_forward.2} parent=23 // pred_check_branch
              %110 = sbr.rel (0) target = $region32
            $region31: #{stem_forward.2} parent=23 // pred_region
              %s112 = ssub.s32 16, 1
              loop: start=0, step=1, limit=1
              $region33: #{stem_forward.2} parent=31 // loop_pre_header
                _
              $region34: #{stem_forward.2} parent=31 // loop_header
                %s114 = sphi 0, %s118
                %p115 = scmp.ge.s32.totalorder %s114, 1
                %s119 = sphi %s104, %s104
                %s120 = sphi %s100, %s100
              $region35: #{stem_forward.2} parent=31 // loop_header_branch
                %117 = sbr.rel (%p115) target = $region39
              $region36: #{stem_forward.2} parent=31 // loop_body
                %v121 = vld [vmem:[%s119] sm:%s112]
                %122 = vst [vmem:[%s120] sm:%s112] %v121
                %v123 = vld [vmem:[%s119 + $0x8] sm:%s112]
                %124 = vst [vmem:[%s120 + $0x4] sm:%s112] %v123
                %v125 = vld [vmem:[%s119 + $0x10] sm:%s112]
                %126 = vst [vmem:[%s120 + $0x8] sm:%s112] %v125
                %v127 = vld [vmem:[%s119 + $0x18] sm:%s112]
                %128 = vst [vmem:[%s120 + $0xc] sm:%s112] %v127
              $region37: #{stem_forward.2} parent=31 // loop_footer
                %s118 = sadd.s32 1, %s114
              $region38: #{stem_forward.2} parent=31 // loop_footer_branch
                %113 = sbr.rel target = $region34
              $region39: #{stem_forward.2} parent=31 // loop_exit
                _
            $region32: #{stem_forward.2} parent=23 // pred_fallthru
              _
          $region24: #{stem_forward.2} parent=19 // pred_fallthru
            _
          %157 = vnop
        $region20: #{stem_forward.2} parent=15 // pred_fallthru
          _
      $region16: #{stem_forward.2} parent=5 // pred_fallthru
        _
      %p158 = scmp.le.s32.totalorder 1, %s7
      %p159 = scmp.lt.s32.totalorder %s7, 5
      %p160 = pnand %p158, %p159
      %p161 = pneg %p160
      // Predicated region
      $region58: #{stem_forward.2} parent=5 // pred_check
        _
      $region59: #{stem_forward.2} parent=5 // pred_check_branch
        %163 = sbr.rel (%p160) target = $region61
      $region60: #{stem_forward.2} parent=5 // pred_region
        %s164 = ssub.s32 %s7, 1
        %s165 = sand.u32 %s34, 1
        %s166 = sand.u32 %s34, 1
        %s167 = smul.addr %s166, 16
        %s168 = scalar_lea.vmem [#allocation2], %s167
        // Predicated region
        $region62: #{stem_forward.2} parent=60 // pred_check
          %p169 = pneg %p47
        $region63: #{stem_forward.2} parent=60 // pred_check_branch
          %171 = sbr.rel (%p169) target = $region65
        $region64: #{stem_forward.2} parent=60 // pred_region
          _
        $region65: #{stem_forward.2} parent=60 // pred_fallthru
          _
        %s172 = sand.u32 %s34, 1
        %s173 = sand.u32 %s34, 1
        %s174 = smul.addr %s173, 16
        %s175 = scalar_lea.vmem [#allocation2], %s174
        %p176 = pneg %p47
        %p177 = pneg %p44
        %p178 = pneg %p75
        %p179 = pneg %p72
        %p180 = scmp.lt.s32.totalorder %s16, 1
        %s181 = scalar_select %p180, %s16, 1
        %p182 = scmp.lt.s32.totalorder %s17, 1
        %s183 = scalar_select %p182, %s17, 1
        %s184 = smul.addr %s183, 4
        %s185 = smul.addr %s181, 8
        %s186 = sadd.s32 %s184, %s185
        %s187 = smul.addr %s186, 8
        %s188 = scalar_lea.vmem %s1, %s187
        %p189 = scmp.lt.s32.totalorder %s16, 1
        %s190 = scalar_select %p189, %s16, 1
        %p191 = scmp.lt.s32.totalorder %s17, 1
        %s192 = scalar_select %p191, %s17, 1
        %s193 = smul.addr %s192, 4
        %s194 = smul.addr %s190, 8
        %s195 = sadd.s32 %s193, %s194
        %s196 = smul.addr %s195, 8
        %s197 = scalar_lea.vmem %s1, %s196
        %v199 = vld [vmem:[%s168] sm:$0xf]
        %v200 = vld [vmem:[%s168 + $0x4] sm:$0xf]
        %v201 = vld [vmem:[%s168 + $0x8] sm:$0xf]
        %v202 = vld [vmem:[%s168 + $0xc] sm:$0xf]
        %v207 = vunpack.c.l.b16 %v199
        %v208 = vunpack.c.l.b16 %v200
        %v209 = vunpack.c.l.b16 %v201
        %v210 = vunpack.c.l.b16 %v202
        %v211 = vpack.c.b16 %v208, %v207
        %v212 = vpack.c.b16 %v210, %v209
        %215 = vmatpush.bf16.xpose.msra.mxu0 0
        %216 = vmatpush.bf16.xpose.msra.mxu0 0
        %217 = vmatpush.bf16.xpose.msra.mxu0 0
        %218 = vmatpush.bf16.xpose.msra.mxu0 0
        %219 = vmatpush.bf16.xpose.msra.mxu0 0
        %220 = vmatpush.bf16.xpose.msra.mxu0 0
        %221 = vmatpush.bf16.xpose.msra.mxu0 %v212
        %222 = vmatpush.bf16.xpose.msra.mxu0 %v211
        %223 = vmatmul.bf16.gmra.mxu0 %v211
        %v224 = vpop.f32.mrf.mxu0
        %v225 = vadd.f32 0.0, %v224
        %v226 = vpop.f32.mrf.mxu0
        %v227 = vadd.f32 0.0, %v226
        %228 = vmatmul.bf16.gmra.mxu0 %v212
        %v229 = vpop.f32.mrf.mxu0
        %v230 = vadd.f32 0.0, %v229
        %v231 = vpop.f32.mrf.mxu0
        %v232 = vadd.f32 0.0, %v231
        %233 = vdwg.mxu0
        %vm234 = vcmask 261120
        %235 = vst.msk [vmem:[%s197] sm:$0xff] %vm234, %v225
        %236 = vst.msk [vmem:[%s197 + $0x8] sm:$0xff] %vm234, %v227
        %237 = vst.msk [vmem:[%s197 + $0x10] sm:$0xff] %vm234, %v230
        %238 = vst.msk [vmem:[%s197 + $0x18] sm:$0xff] %vm234, %v232
        %p239 = scmp.lt.s32.totalorder %s16, 1
        %s240 = scalar_select %p239, %s16, 1
        %p241 = scmp.lt.s32.totalorder %s17, 1
        %s242 = scalar_select %p241, %s17, 1
        %s243 = smul.addr %s242, 4
        %s244 = smul.addr %s240, 8
        %s245 = sadd.s32 %s243, %s244
        %s246 = smul.addr %s245, 8
        %s247 = scalar_lea.vmem %s1, %s246
        // Predicated region
        $region66: #{stem_forward.2} parent=60 // pred_check
          %p248 = pneg %p72
        $region67: #{stem_forward.2} parent=60 // pred_check_branch
          %250 = sbr.rel (%p248) target = $region69
        $region68: #{stem_forward.2} parent=60 // pred_region
          _
        $region69: #{stem_forward.2} parent=60 // pred_fallthru
          _
      $region61: #{stem_forward.2} parent=5 // pred_fallthru
        _
      %p251 = scmp.le.s32.totalorder 2, %s7
      // Predicated region
      $region70: #{stem_forward.2} parent=5 // pred_check
        %p252 = pneg %p251
      $region71: #{stem_forward.2} parent=5 // pred_check_branch
        %254 = sbr.rel (%p252) target = $region73
      $region72: #{stem_forward.2} parent=5 // pred_region
        %s255 = ssub.s32 %s7, 2
        // Predicated region
        $region74: #{stem_forward.2} parent=72 // pred_check
          %p256 = pneg %p78
        $region75: #{stem_forward.2} parent=72 // pred_check_branch
          %258 = sbr.rel (%p256) target = $region77
        $region76: #{stem_forward.2} parent=72 // pred_region
          %p259 = scmp.lt.s32.totalorder %s18, 1
          %s260 = scalar_select %p259, %s18, 1
          %p261 = scmp.lt.s32.totalorder %s19, 1
          %s262 = scalar_select %p261, %s19, 1
          %s263 = smul.addr %s262, 4
          %s264 = smul.addr %s260, 8
          %s265 = sadd.s32 %s263, %s264
          %s266 = smul.addr %s265, 8
          %s267 = scalar_lea.vmem %s1, %s266
        $region77: #{stem_forward.2} parent=72 // pred_fallthru
          _
      $region73: #{stem_forward.2} parent=5 // pred_fallthru
        _
    $region6: #{stem_forward.2} parent=1 // loop_footer
      %s11 = sadd.s32 1, %s7
    $region7: #{stem_forward.2} parent=1 // loop_footer_branch
      %6 = sbr.rel target = $region3
    $region8: #{stem_forward.2} parent=1 // loop_exit
      _

// kernel: stem_forward.3
$region0: #{stem_forward.3}
  #allocation0 [shape = 'u32[]', space=smem, size = 0x4, offset = 0x4, fixed_abs, tag = 'smem constant byte address 0x4 - core index']
  #allocation1 [shape = 'u32[72,128]{1,0:T(1,128)}', space=vmem, size = 0x9000, scoped, tag = 'internal scratch']
  %s0 = inlined_call_operand.vmem [shape: bf16[2,32,256], index: 0, kind: input, shape index: {}]
  %s1 = inlined_call_operand.vmem [shape: bf16[32,32], index: 1, kind: input, shape index: {}]
  %s2 = inlined_call_operand.vmem [shape: f32[32,1], index: 2, kind: input, shape index: {}]
  %s3 = inlined_call_operand.vmem [shape: f32[32,1], index: 3, kind: input, shape index: {}]
  %s4 = inlined_call_operand.vmem [shape: f32[2,32,256], index: 4, kind: output, shape index: {}]
  %s5 = sld [smem:[#allocation0]]
  $region124: #{stem_forward.3} parent=0
    _
  %s7 = ssub.s32 1, %s5
  %s8 = scalar_select 0, %s7, %s5
  $region1: #{stem_forward.3} parent=0
    #allocation2 [shape = 'u8[16384]{0}', space=vmem, size = 0x4000, scoped, tag = 'input window, operand 0']
    #allocation3 [shape = 'u8[32768]{0}', space=vmem, size = 0x8000, scoped, tag = 'output window, operand 0']
    loop: start=0, step=1, limit=6
    $region2: #{stem_forward.3} parent=1 // loop_pre_header
      _
    $region3: #{stem_forward.3} parent=1 // loop_header
      %s10 = sphi 0, %s14
      %p11 = scmp.ge.s32.totalorder %s10, 6
      %s17 = sphi 0, %s29
      %s18 = sphi 0, %s25
      %s19 = sphi 0, %s17
      %s20 = sphi 0, %s18
      %s21 = sphi 0, %s19
      %s22 = sphi 0, %s20
      %s34 = sphi 0, %s36
      %s37 = sphi 0, %s34
      %s38 = sphi 0, %s37
      %s54 = sphi 0, %s38
      %s58 = sphi 0, %s58
      %s60 = sphi 0, %s58
      %s61 = sphi 0, %s60
      %s75 = sphi 0, %s61
      %s79 = sphi 0, %s79
      %s81 = sphi 0, %s79
      %s82 = sphi 0, %s81
      %s96 = sphi 0, %s82
      %s100 = sphi 0, %s100
      %s102 = sphi 0, %s100
      %s103 = sphi 0, %s102
      %s117 = sphi 0, %s103
      %s125 = sphi 0, %s127
      %s128 = sphi 0, %s125
      %s129 = sphi 0, %s128
      %s145 = sphi 0, %s129
    $region4: #{stem_forward.3} parent=1 // loop_header_branch
      %13 = sbr.rel (%p11) target = $region8
    $region5: #{stem_forward.3} parent=1 // loop_body
      %s15 = ssub.s32 %s10, 1
      %s16 = ssub.s32 %s10, 2
      %s23 = sadd.s32 1, %s18
      %p24 = scmp.ge.s32.totalorder %s23, 2
      %s25 = scalar_select %p24, 0, %s23
      %s26 = sadd.s32 1, %s17
      %s27 = scalar_select %p24, %s26, %s17
      %p28 = scmp.ge.s32.totalorder %s27, 2
      %s29 = scalar_select %p28, 0, %s27
      %s30 = ssub.s32 %s17, %s29
      %s31 = ssub.s32 %s18, %s25
      %s32 = sor.u32 %s30, %s31
      %p33 = scmp.eq.s32.totalorder %s32, 0
      %s35 = sadd.s32 %s34, 1
      %s36 = scalar_select %p33, %s34, %s35
      %p39 = pneg %p33
      %p40 = scmp.eq.s32.totalorder %s10, 3
      %p41 = por %p39, %p40
      %p42 = scmp.ne.s32.totalorder %s34, %s37
      %p43 = scmp.eq.s32.totalorder %s10, 0
      %p44 = por %p42, %p43
      %p45 = scmp.ne.s32.totalorder %s34, %s37
      %p46 = scmp.eq.s32.totalorder %s15, 3
      %p47 = por %p45, %p46
      %p48 = scmp.ne.s32.totalorder %s37, %s38
      %p49 = scmp.eq.s32.totalorder %s15, 0
      %p50 = por %p48, %p49
      %p51 = scmp.ne.s32.totalorder %s37, %s38
      %p52 = scmp.eq.s32.totalorder %s16, 3
      %p53 = por %p51, %p52
      %p55 = scmp.ne.s32.totalorder %s38, %s54
      %p56 = scmp.eq.s32.totalorder %s16, 0
      %p57 = por %p55, %p56
      %s59 = sadd.s32 %s58, 1
      %p62 = scmp.eq.s32.totalorder %s10, 3
      %p63 = scmp.ne.s32.totalorder %s58, %s60
      %p64 = scmp.eq.s32.totalorder %s10, 0
      %p65 = por %p63, %p64
      %p66 = scmp.ne.s32.totalorder %s58, %s60
      %p67 = scmp.eq.s32.totalorder %s15, 3
      %p68 = por %p66, %p67
      %p69 = scmp.ne.s32.totalorder %s60, %s61
      %p70 = scmp.eq.s32.totalorder %s15, 0
      %p71 = por %p69, %p70
      %p72 = scmp.ne.s32.totalorder %s60, %s61
      %p73 = scmp.eq.s32.totalorder %s16, 3
      %p74 = por %p72, %p73
      %p76 = scmp.ne.s32.totalorder %s61, %s75
      %p77 = scmp.eq.s32.totalorder %s16, 0
      %p78 = por %p76, %p77
      %s80 = sadd.s32 %s79, 1
      %p83 = scmp.eq.s32.totalorder %s10, 3
      %p84 = scmp.ne.s32.totalorder %s79, %s81
      %p85 = scmp.eq.s32.totalorder %s10, 0
      %p86 = por %p84, %p85
      %p87 = scmp.ne.s32.totalorder %s79, %s81
      %p88 = scmp.eq.s32.totalorder %s15, 3
      %p89 = por %p87, %p88
      %p90 = scmp.ne.s32.totalorder %s81, %s82
      %p91 = scmp.eq.s32.totalorder %s15, 0
      %p92 = por %p90, %p91
      %p93 = scmp.ne.s32.totalorder %s81, %s82
      %p94 = scmp.eq.s32.totalorder %s16, 3
      %p95 = por %p93, %p94
      %p97 = scmp.ne.s32.totalorder %s82, %s96
      %p98 = scmp.eq.s32.totalorder %s16, 0
      %p99 = por %p97, %p98
      %s101 = sadd.s32 %s100, 1
      %p104 = scmp.eq.s32.totalorder %s10, 3
      %p105 = scmp.ne.s32.totalorder %s100, %s102
      %p106 = scmp.eq.s32.totalorder %s10, 0
      %p107 = por %p105, %p106
      %p108 = scmp.ne.s32.totalorder %s100, %s102
      %p109 = scmp.eq.s32.totalorder %s15, 3
      %p110 = por %p108, %p109
      %p111 = scmp.ne.s32.totalorder %s102, %s103
      %p112 = scmp.eq.s32.totalorder %s15, 0
      %p113 = por %p111, %p112
      %p114 = scmp.ne.s32.totalorder %s102, %s103
      %p115 = scmp.eq.s32.totalorder %s16, 3
      %p116 = por %p114, %p115
      %p118 = scmp.ne.s32.totalorder %s103, %s117
      %p119 = scmp.eq.s32.totalorder %s16, 0
      %p120 = por %p118, %p119
      %s121 = ssub.s32 %s17, %s29
      %s122 = ssub.s32 %s18, %s25
      %s123 = sor.u32 %s121, %s122
      %p124 = scmp.eq.s32.totalorder %s123, 0
      %s126 = sadd.s32 %s125, 1
      %s127 = scalar_select %p124, %s125, %s126
      %p130 = pneg %p124
      %p131 = scmp.eq.s32.totalorder %s10, 3
      %p132 = por %p130, %p131
      %p133 = scmp.ne.s32.totalorder %s125, %s128
      %p134 = scmp.eq.s32.totalorder %s10, 0
      %p135 = por %p133, %p134
      %p136 = scmp.ne.s32.totalorder %s125, %s128
      %p137 = scmp.eq.s32.totalorder %s15, 3
      %p138 = por %p136, %p137
      %p139 = scmp.ne.s32.totalorder %s128, %s129
      %p140 = scmp.eq.s32.totalorder %s15, 0
      %p141 = por %p139, %p140
      %p142 = scmp.ne.s32.totalorder %s128, %s129
      %p143 = scmp.eq.s32.totalorder %s16, 3
      %p144 = por %p142, %p143
      %p146 = scmp.ne.s32.totalorder %s129, %s145
      %p147 = scmp.eq.s32.totalorder %s16, 0
      %p148 = por %p146, %p147
      %p149 = scmp.le.s32.totalorder 1, %s10
      %p150 = scmp.lt.s32.totalorder %s10, 5
      %p151 = pnand %p149, %p150
      %p152 = pneg %p151
      // Predicated region
      $region9: #{stem_forward.3} parent=5 // pred_check
        _
      $region10: #{stem_forward.3} parent=5 // pred_check_branch
        %154 = sbr.rel (%p151) target = $region12
      $region11: #{stem_forward.3} parent=5 // pred_region
        %s155 = ssub.s32 %s10, 1
        // Predicated region
        $region13: #{stem_forward.3} parent=11 // pred_check
          %p156 = pneg %p71
        $region14: #{stem_forward.3} parent=11 // pred_check_branch
          %158 = sbr.rel (%p156) target = $region16
        $region15: #{stem_forward.3} parent=11 // pred_region
          _
        $region16: #{stem_forward.3} parent=11 // pred_fallthru
          _
        // Predicated region
        $region17: #{stem_forward.3} parent=11 // pred_check
          %p159 = pneg %p92
        $region18: #{stem_forward.3} parent=11 // pred_check_branch
          %161 = sbr.rel (%p159) target = $region20
        $region19: #{stem_forward.3} parent=11 // pred_region
          _
        $region20: #{stem_forward.3} parent=11 // pred_fallthru
          _
        // Predicated region
        $region21: #{stem_forward.3} parent=11 // pred_check
          %p162 = pneg %p113
        $region22: #{stem_forward.3} parent=11 // pred_check_branch
          %164 = sbr.rel (%p162) target = $region24
        $region23: #{stem_forward.3} parent=11 // pred_region
          _
        $region24: #{stem_forward.3} parent=11 // pred_fallthru
          _
      $region12: #{stem_forward.3} parent=5 // pred_fallthru
        _
      %p165 = scmp.lt.s32.totalorder %s10, 4
      // Predicated region
      $region25: #{stem_forward.3} parent=5 // pred_check
        %p166 = pneg %p165
      $region26: #{stem_forward.3} parent=5 // pred_check_branch
        %168 = sbr.rel (%p166) target = $region28
      $region27: #{stem_forward.3} parent=5 // pred_region
        // Predicated region
        $region29: #{stem_forward.3} parent=27 // pred_check
          %p169 = pneg %p44
        $region30: #{stem_forward.3} parent=27 // pred_check_branch
          %171 = sbr.rel (%p169) target = $region32
        $region31: #{stem_forward.3} parent=27 // pred_region
          %s172 = sand.u32 %s34, 1
          %s173 = sand.u32 %s34, 1
          %s174 = smul.addr %s173, 16
          %s175 = scalar_lea.vmem [#allocation2], %s174
          %s176 = smul.addr %s17, 8
          %s177 = sadd.s32 %s18, %s176
          %s178 = smul.addr %s177, 4
          %s179 = scalar_lea.vmem %s0, %s178
          // Predicated region
          $region33: #{stem_forward.3} parent=31 // pred_check
            _
          $region34: #{stem_forward.3} parent=31 // pred_check_branch
            %181 = sbr.rel (0) target = $region36
          $region35: #{stem_forward.3} parent=31 // pred_region
            // Predicated region
            $region37: #{stem_forward.3} parent=35 // pred_check
              _
            $region38: #{stem_forward.3} parent=35 // pred_check_branch
              %183 = sbr.rel target = $region40
            $region39: #{stem_forward.3} parent=35 // pred_region
              // Predicated region
              $region52: #{stem_forward.3} parent=39 // pred_check
                _
              $region53: #{stem_forward.3} parent=39 // pred_check_branch
                %205 = sbr.rel (0) target = $region55
              $region54: #{stem_forward.3} parent=39 // pred_region
                loop: start=0, step=1, limit=1
                $region56: #{stem_forward.3} parent=54 // loop_pre_header
                  _
                $region57: #{stem_forward.3} parent=54 // loop_header
                  %s207 = sphi 0, %s211
                  %p208 = scmp.ge.s32.totalorder %s207, 1
                  %s212 = sphi %s179, %s179
                  %s213 = sphi %s175, %s175
                $region58: #{stem_forward.3} parent=54 // loop_header_branch
                  %210 = sbr.rel (%p208) target = $region62
                $region59: #{stem_forward.3} parent=54 // loop_body
                  _
                $region60: #{stem_forward.3} parent=54 // loop_footer
                  %s211 = sadd.s32 1, %s207
                $region61: #{stem_forward.3} parent=54 // loop_footer_branch
                  %206 = sbr.rel target = $region57
                $region62: #{stem_forward.3} parent=54 // loop_exit
                  _
                %s215 = ssub.s32 16, 1
                loop: start=0, step=1, limit=1
                $region63: #{stem_forward.3} parent=54 // loop_pre_header
                  _
                $region64: #{stem_forward.3} parent=54 // loop_header
                  %s217 = sphi 0, %s221
                  %p218 = scmp.ge.s32.totalorder %s217, 1
                  %s222 = sphi %s179, %s179
                  %s223 = sphi %s175, %s175
                $region65: #{stem_forward.3} parent=54 // loop_header_branch
                  %220 = sbr.rel (%p218) target = $region69
                $region66: #{stem_forward.3} parent=54 // loop_body
                  %v224 = vld [vmem:[%s222] sm:%s215]
                  %225 = vst [vmem:[%s223] sm:%s215] %v224
                  %v226 = vld [vmem:[%s222 + $0x8] sm:%s215]
                  %227 = vst [vmem:[%s223 + $0x4] sm:%s215] %v226
                  %v228 = vld [vmem:[%s222 + $0x10] sm:%s215]
                  %229 = vst [vmem:[%s223 + $0x8] sm:%s215] %v228
                  %v230 = vld [vmem:[%s222 + $0x18] sm:%s215]
                  %231 = vst [vmem:[%s223 + $0xc] sm:%s215] %v230
                $region67: #{stem_forward.3} parent=54 // loop_footer
                  %s221 = sadd.s32 1, %s217
                $region68: #{stem_forward.3} parent=54 // loop_footer_branch
                  %216 = sbr.rel target = $region64
                $region69: #{stem_forward.3} parent=54 // loop_exit
                  _
              $region55: #{stem_forward.3} parent=39 // pred_fallthru
                _
            $region40: #{stem_forward.3} parent=35 // pred_fallthru
              _
            // Predicated region
            $region41: #{stem_forward.3} parent=35 // pred_check
              _
            $region42: #{stem_forward.3} parent=35 // pred_check_branch
              %185 = sbr.rel (0) target = $region44
            $region43: #{stem_forward.3} parent=35 // pred_region
              %s187 = ssub.s32 16, 1
              loop: start=0, step=1, limit=1
              $region45: #{stem_forward.3} parent=43 // loop_pre_header
                _
              $region46: #{stem_forward.3} parent=43 // loop_header
                %s189 = sphi 0, %s193
                %p190 = scmp.ge.s32.totalorder %s189, 1
                %s194 = sphi %s179, %s179
                %s195 = sphi %s175, %s175
              $region47: #{stem_forward.3} parent=43 // loop_header_branch
                %192 = sbr.rel (%p190) target = $region51
              $region48: #{stem_forward.3} parent=43 // loop_body
                %v196 = vld [vmem:[%s194] sm:%s187]
                %197 = vst [vmem:[%s195] sm:%s187] %v196
                %v198 = vld [vmem:[%s194 + $0x8] sm:%s187]
                %199 = vst [vmem:[%s195 + $0x4] sm:%s187] %v198
                %v200 = vld [vmem:[%s194 + $0x10] sm:%s187]
                %201 = vst [vmem:[%s195 + $0x8] sm:%s187] %v200
                %v202 = vld [vmem:[%s194 + $0x18] sm:%s187]
                %203 = vst [vmem:[%s195 + $0xc] sm:%s187] %v202
              $region49: #{stem_forward.3} parent=43 // loop_footer
                %s193 = sadd.s32 1, %s189
              $region50: #{stem_forward.3} parent=43 // loop_footer_branch
                %188 = sbr.rel target = $region46
              $region51: #{stem_forward.3} parent=43 // loop_exit
                _
            $region44: #{stem_forward.3} parent=35 // pred_fallthru
              _
          $region36: #{stem_forward.3} parent=31 // pred_fallthru
            _
          %232 = vnop
        $region32: #{stem_forward.3} parent=27 // pred_fallthru
          _
      $region28: #{stem_forward.3} parent=5 // pred_fallthru
        _
      %p233 = scmp.le.s32.totalorder 1, %s10
      %p234 = scmp.lt.s32.totalorder %s10, 5
      %p235 = pnand %p233, %p234
      %p236 = pneg %p235
      // Predicated region
      $region70: #{stem_forward.3} parent=5 // pred_check
        _
      $region71: #{stem_forward.3} parent=5 // pred_check_branch
        %238 = sbr.rel (%p235) target = $region73
      $region72: #{stem_forward.3} parent=5 // pred_region
        %s239 = ssub.s32 %s10, 1
        %s240 = sand.u32 %s37, 1
        %s241 = sand.u32 %s37, 1
        %s242 = smul.addr %s241, 16
        %s243 = scalar_lea.vmem [#allocation2], %s242
        // Predicated region
        $region74: #{stem_forward.3} parent=72 // pred_check
          %p244 = pneg %p50
        $region75: #{stem_forward.3} parent=72 // pred_check_branch
          %246 = sbr.rel (%p244) target = $region77
        $region76: #{stem_forward.3} parent=72 // pred_region
          _
        $region77: #{stem_forward.3} parent=72 // pred_fallthru
          _
        %s247 = sand.u32 %s37, 1
        %s248 = sand.u32 %s37, 1
        %s249 = smul.addr %s248, 16
        %s250 = scalar_lea.vmem [#allocation2], %s249
        %p251 = pneg %p50
        %p252 = pneg %p47
        %p253 = pneg %p71
        %p254 = pneg %p68
        %p255 = pneg %p92
        %p256 = pneg %p89
        %p257 = pneg %p113
        %p258 = pneg %p110
        %p259 = pneg %p141
        %p260 = pneg %p138
        %s261 = sand.u32 %s128, 1
        %s262 = sand.u32 %s128, 1
        %s263 = smul.addr %s262, 32
        %s264 = scalar_lea.vmem [#allocation3], %s263
        %v266 = vld [vmem:[%s1] sm:$0xf]
        %v267 = vld [vmem:[%s1 + $0x4] sm:$0xf]
        %v268 = vld [vmem:[%s1 + $0x8] sm:$0xf]
        %v269 = vld [vmem:[%s1 + $0xc] sm:$0xf]
        %v270 = vld [vmem:[%s243] sm:$0xf]
        %v271 = vld [vmem:[%s243 + $0x4] sm:$0xf]
        %v272 = vld [vmem:[%s243 + $0x8] sm:$0xf]
        %v273 = vld [vmem:[%s243 + $0xc] sm:$0xf]
        %v278 = vunpack.c.l.b16 %v266
        %v279 = vunpack.c.l.b16 %v267
        %v280 = vunpack.c.l.b16 %v268
        %v281 = vunpack.c.l.b16 %v269
        %v282 = vpack.c.b16 %v279, %v278
        %v283 = vpack.c.b16 %v281, %v280
        %v288 = vunpack.c.l.b16 %v270
        %v289 = vunpack.c.l.b16 %v271
        %v290 = vunpack.c.l.b16 %v272
        %v291 = vunpack.c.l.b16 %v273
        %v292 = vpack.c.b16 %v289, %v288
        %v293 = vpack.c.b16 %v291, %v290
        %vm296 = vcmask 261120
        %v298 = vsel %vm296, %v282, 0
        %v301 = vsel %vm296, %v283, 0
        %303 = vmatpush.bf16.msra.mxu0 0
        %304 = vmatpush.bf16.msra.mxu0 0
        %305 = vmatpush.bf16.msra.mxu0 0
        %306 = vmatpush.bf16.msra.mxu0 0
        %307 = vmatpush.bf16.msra.mxu0 0
        %308 = vmatpush.bf16.msra.mxu0 0
        %309 = vmatpush.bf16.msra.mxu0 %v293
        %310 = vmatpush.bf16.msra.mxu0 %v292
        %311 = vmatmul.bf16.gmra.mxu0 %v298
        %v312 = vpop.f32.mrf.mxu0
        %v313 = vadd.f32 0.0, %v312
        %v314 = vpop.f32.mrf.mxu0
        %v315 = vadd.f32 0.0, %v314
        %316 = vmatmul.bf16.gmra.mxu0 %v301
        %v317 = vpop.f32.mrf.mxu0
        %v318 = vadd.f32 0.0, %v317
        %v319 = vpop.f32.mrf.mxu0
        %v320 = vadd.f32 0.0, %v319
        %321 = vdwg.mxu0
        %v322 = vld [vmem:[%s2] sm:$0xff]
        %v323 = vld [vmem:[%s2 + $0x8] sm:$0xff]
        %v324 = vld [vmem:[%s2 + $0x10] sm:$0xff]
        %v325 = vld [vmem:[%s2 + $0x18] sm:$0xff]
        %327 = vset.pattern.permute.xlu0 0
        %328 = vperm.xlu0 %327, %v322
        %v329 = vpop.permute.xlu0 %328
        %332 = vset.pattern.permute.xlu0 0
        %333 = vperm.xlu0 %332, %v323
        %v334 = vpop.permute.xlu0 %333
        %337 = vset.pattern.permute.xlu0 0
        %338 = vperm.xlu0 %337, %v324
        %v339 = vpop.permute.xlu0 %338
        %342 = vset.pattern.permute.xlu0 0
        %343 = vperm.xlu0 %342, %v325
        %v344 = vpop.permute.xlu0 %343
        %v346 = vmul.f32 %v313, %v329
        %v347 = vmul.f32 %v315, %v334
        %v348 = vmul.f32 %v318, %v339
        %v349 = vmul.f32 %v320, %v344
        %v350 = vld [vmem:[%s3] sm:$0xff]
        %v351 = vld [vmem:[%s3 + $0x8] sm:$0xff]
        %v352 = vld [vmem:[%s3 + $0x10] sm:$0xff]
        %v353 = vld [vmem:[%s3 + $0x18] sm:$0xff]
        %355 = vset.pattern.permute.xlu0 0
        %356 = vperm.xlu0 %355, %v350
        %v357 = vpop.permute.xlu0 %356
        %360 = vset.pattern.permute.xlu0 0
        %361 = vperm.xlu0 %360, %v351
        %v362 = vpop.permute.xlu0 %361
        %365 = vset.pattern.permute.xlu0 0
        %366 = vperm.xlu0 %365, %v352
        %v367 = vpop.permute.xlu0 %366
        %370 = vset.pattern.permute.xlu0 0
        %371 = vperm.xlu0 %370, %v353
        %v372 = vpop.permute.xlu0 %371
        %v374 = vadd.f32 %v346, %v357
        %v375 = vadd.f32 %v347, %v362
        %v376 = vadd.f32 %v348, %v367
        %v377 = vadd.f32 %v349, %v372
        %v378 = vmax.f32 %v374, 0.0
        %v379 = vmax.f32 %v375, 0.0
        %v380 = vmax.f32 %v376, 0.0
        %v381 = vmax.f32 %v377, 0.0
        %382 = vst [vmem:[%s264] sm:$0xff] %v378
        %383 = vst [vmem:[%s264 + $0x8] sm:$0xff] %v379
        %384 = vst [vmem:[%s264 + $0x10] sm:$0xff] %v380
        %385 = vst [vmem:[%s264 + $0x18] sm:$0xff] %v381
        %s386 = sand.u32 %s128, 1
        %s387 = sand.u32 %s128, 1
        %s388 = smul.addr %s387, 32
        %s389 = scalar_lea.vmem [#allocation3], %s388
        // Predicated region
        $region78: #{stem_forward.3} parent=72 // pred_check
          %p390 = pneg %p138
        $region79: #{stem_forward.3} parent=72 // pred_check_branch
          %392 = sbr.rel (%p390) target = $region81
        $region80: #{stem_forward.3} parent=72 // pred_region
          %s393 = smul.addr %s19, 8
          %s394 = sadd.s32 %s20, %s393
          %s395 = smul.addr %s394, 8
          %s396 = scalar_lea.vmem %s4, %s395
          // Predicated region
          $region82: #{stem_forward.3} parent=80 // pred_check
            _
          $region83: #{stem_forward.3} parent=80 // pred_check_branch
            %398 = sbr.rel (0) target = $region85
          $region84: #{stem_forward.3} parent=80 // pred_region
            // Predicated region
            $region86: #{stem_forward.3} parent=84 // pred_check
              _
            $region87: #{stem_forward.3} parent=84 // pred_check_branch
              %400 = sbr.rel (0) target = $region89
            $region88: #{stem_forward.3} parent=84 // pred_region
              // Predicated region
              $region101: #{stem_forward.3} parent=88 // pred_check
                _
              $region102: #{stem_forward.3} parent=88 // pred_check_branch
                %422 = sbr.rel (0) target = $region104
              $region103: #{stem_forward.3} parent=88 // pred_region
                loop: start=0, step=1, limit=1
                $region105: #{stem_forward.3} parent=103 // loop_pre_header
                  _
                $region106: #{stem_forward.3} parent=103 // loop_header
                  %s424 = sphi 0, %s428
                  %p425 = scmp.ge.s32.totalorder %s424, 1
                  %s429 = sphi %s389, %s389
                  %s430 = sphi %s396, %s396
                $region107: #{stem_forward.3} parent=103 // loop_header_branch
                  %427 = sbr.rel (%p425) target = $region111
                $region108: #{stem_forward.3} parent=103 // loop_body
                  %v431 = vld [vmem:[%s429] sm:$0xff]
                  %432 = vst [vmem:[%s430] sm:$0xff] %v431
                  %v433 = vld [vmem:[%s429 + $0x8] sm:$0xff]
                  %434 = vst [vmem:[%s430 + $0x10] sm:$0xff] %v433
                  %v435 = vld [vmem:[%s429 + $0x10] sm:$0xff]
                  %436 = vst [vmem:[%s430 + $0x20] sm:$0xff] %v435
                  %v437 = vld [vmem:[%s429 + $0x18] sm:$0xff]
                  %438 = vst [vmem:[%s430 + $0x30] sm:$0xff] %v437
                $region109: #{stem_forward.3} parent=103 // loop_footer
                  %s428 = sadd.s32 1, %s424
                $region110: #{stem_forward.3} parent=103 // loop_footer_branch
                  %423 = sbr.rel target = $region106
                $region111: #{stem_forward.3} parent=103 // loop_exit
                  _
              $region104: #{stem_forward.3} parent=88 // pred_fallthru
                _
              // Predicated region
              $region112: #{stem_forward.3} parent=88 // pred_check
                _
              $region113: #{stem_forward.3} parent=88 // pred_check_branch
                %440 = sbr.rel target = $region115
              $region114: #{stem_forward.3} parent=88 // pred_region
                _
              $region115: #{stem_forward.3} parent=88 // pred_fallthru
                _
            $region89: #{stem_forward.3} parent=84 // pred_fallthru
              _
            // Predicated region
            $region90: #{stem_forward.3} parent=84 // pred_check
              _
            $region91: #{stem_forward.3} parent=84 // pred_check_branch
              %402 = sbr.rel target = $region93
            $region92: #{stem_forward.3} parent=84 // pred_region
              %s404 = ssub.s32 256, 1
              loop: start=0, step=1, limit=1
              $region94: #{stem_forward.3} parent=92 // loop_pre_header
                _
              $region95: #{stem_forward.3} parent=92 // loop_header
                %s406 = sphi 0, %s410
                %p407 = scmp.ge.s32.totalorder %s406, 1
                %s411 = sphi %s389, %s389
                %s412 = sphi %s396, %s396
              $region96: #{stem_forward.3} parent=92 // loop_header_branch
                %409 = sbr.rel (%p407) target = $region100
              $region97: #{stem_forward.3} parent=92 // loop_body
                %v413 = vld [vmem:[%s411] sm:%s404]
                %414 = vst [vmem:[%s412] sm:%s404] %v413
                %v415 = vld [vmem:[%s411 + $0x8] sm:%s404]
                %416 = vst [vmem:[%s412 + $0x10] sm:%s404] %v415
                %v417 = vld [vmem:[%s411 + $0x10] sm:%s404]
                %418 = vst [vmem:[%s412 + $0x20] sm:%s404] %v417
                %v419 = vld [vmem:[%s411 + $0x18] sm:%s404]
                %420 = vst [vmem:[%s412 + $0x30] sm:%s404] %v419
              $region98: #{stem_forward.3} parent=92 // loop_footer
                %s410 = sadd.s32 1, %s406
              $region99: #{stem_forward.3} parent=92 // loop_footer_branch
                %405 = sbr.rel target = $region95
              $region100: #{stem_forward.3} parent=92 // loop_exit
                _
            $region93: #{stem_forward.3} parent=84 // pred_fallthru
              _
          $region85: #{stem_forward.3} parent=80 // pred_fallthru
            _
          %441 = vnop
        $region81: #{stem_forward.3} parent=72 // pred_fallthru
          _
      $region73: #{stem_forward.3} parent=5 // pred_fallthru
        _
      %p442 = scmp.le.s32.totalorder 2, %s10
      // Predicated region
      $region116: #{stem_forward.3} parent=5 // pred_check
        %p443 = pneg %p442
      $region117: #{stem_forward.3} parent=5 // pred_check_branch
        %445 = sbr.rel (%p443) target = $region119
      $region118: #{stem_forward.3} parent=5 // pred_region
        %s446 = ssub.s32 %s10, 2
        // Predicated region
        $region120: #{stem_forward.3} parent=118 // pred_check
          %p447 = pneg %p144
        $region121: #{stem_forward.3} parent=118 // pred_check_branch
          %449 = sbr.rel (%p447) target = $region123
        $region122: #{stem_forward.3} parent=118 // pred_region
          %s450 = sand.u32 %s129, 1
          %s451 = sand.u32 %s129, 1
          %s452 = smul.addr %s451, 32
          %s453 = scalar_lea.vmem [#allocation3], %s452
        $region123: #{stem_forward.3} parent=118 // pred_fallthru
          _
      $region119: #{stem_forward.3} parent=5 // pred_fallthru
        _
    $region6: #{stem_forward.3} parent=1 // loop_footer
      %s14 = sadd.s32 1, %s10
    $region7: #{stem_forward.3} parent=1 // loop_footer_branch
      %9 = sbr.rel target = $region3
    $region8: #{stem_forward.3} parent=1 // loop_exit
      _

</llo_original>
